<compile_context>
chip_gen: v7x
topology: tpu7x:2x2x1
jax: 0.10.0
libtpu: 0.0.40
codegen_flags: <defaults>
</compile_context>

<pallas_src>
import math

import jax
import jax.numpy as jnp
from jax.experimental import pallas as pl
from jax.experimental.pallas import tpu as pltpu


def _folded_linear_kernel(w_ref, b_ref, x_ref, o_ref):
    # w_ref: (s*in_c, s*out_c)  block-diag kron(I_s, W.T), VMEM-resident
    # b_ref: (1, s*out_c)       tiled bias, VMEM-resident
    # x_ref: (tm, s*in_c)       lane-dense folded input tile (natural layout)
    # o_ref: (tm, s*out_c)      lane-dense folded output tile (natural layout)
    acc = jnp.dot(x_ref[...], w_ref[...], preferred_element_type=jnp.float32)
    o_ref[...] = (acc + b_ref[...]).astype(o_ref.dtype)


def baseline_forward(flow_x, weight, bias, *, tile_rows=2048):
    """Pallas equivalent of Baseline.forward.

    flow_x : (B, N, H, D)
    weight : (out_c, in_c)  (PyTorch nn.Linear layout, in_c = H*D)
    bias   : (out_c,)
    returns: (B, N, 1, out_c)
    """
    B, N = flow_x.shape[0], flow_x.shape[1]
    in_c = math.prod(flow_x.shape[2:])          # static Python int
    out_c = weight.shape[0]
    M = B * N

    # Fold factor s: smallest s with 128 | s*in_c and 128 | s*out_c.
    s_in = 128 // math.gcd(in_c, 128)
    s_out = 128 // math.gcd(out_c, 128)
    s = (s_in * s_out) // math.gcd(s_in, s_out)

    x2d = flow_x.reshape(M, in_c)               # .view(B, N, -1) collapsed
    M_pad = s * pl.cdiv(M, s)
    if M_pad != M:
        # TODO(synk): only hit when B*N % s != 0; a remainder-handling second
        # call would avoid this one extra HBM pass over the input.
        x2d = jnp.pad(x2d, ((0, M_pad - M), (0, 0)))
    M_f = M_pad // s

    x_fold = x2d.reshape(M_f, s * in_c)         # free reshape, natural layout

    w_f32 = weight.astype(jnp.float32)
    # Block-diagonal weight: folded_x @ kron(I_s, W.T) == per-row [x_j @ W.T].
    w_blk = jnp.kron(jnp.eye(s, dtype=jnp.float32), w_f32.T)   # (s*in_c, s*out_c)
    b_blk = jnp.tile(bias.astype(jnp.float32), s).reshape(1, s * out_c)

    # Tile selection: big tiles (fewer grid steps, bigger DMAs); keep >= 2
    # steps when there is enough work so v7x can shard across both TCs.
    tm = min(tile_rows, M_f)
    if M_f >= 16 and pl.cdiv(M_f, tm) < 2:
        tm = pl.cdiv(M_f, 2)
    if tm < M_f:
        tm = max(8, ((tm + 7) // 8) * 8)        # sublane-aligned block rows
        if tm >= M_f:
            tm = M_f
    grid = pl.cdiv(M_f, tm)                     # last block may overrun; padded
                                                # reads only pollute dropped rows

    act_bytes = jnp.dtype(flow_x.dtype).itemsize
    cost = pl.CostEstimate(
        flops=2 * M_f * (s * in_c) * (s * out_c),
        transcendentals=0,
        bytes_accessed=int(
            act_bytes * (M_pad * in_c + M_pad * out_c)
            + 4 * (s * in_c * s * out_c + s * out_c)
        ),
    )

    out_fold = pl.pallas_call(
        _folded_linear_kernel,
        out_shape=jax.ShapeDtypeStruct((M_f, s * out_c), flow_x.dtype),
        grid_spec=pltpu.PrefetchScalarGridSpec(
            num_scalar_prefetch=0,
            grid=(grid,),
            in_specs=[
                pl.BlockSpec((s * in_c, s * out_c), lambda i: (0, 0)),  # W_blk, resident
                pl.BlockSpec((1, s * out_c), lambda i: (0, 0)),         # bias, resident
                pl.BlockSpec((tm, s * in_c), lambda i: (i, 0)),         # folded X tile
            ],
            out_specs=pl.BlockSpec((tm, s * out_c), lambda i: (i, 0)),  # folded out tile
        ),
        compiler_params=pltpu.CompilerParams(
            dimension_semantics=("parallel",),
        ),
        cost_estimate=cost,
    )(w_blk, b_blk, x_fold)

    # Unfold: (M_f, s*out_c) -> (M_pad, out_c) is a free reshape (row-major),
    # then slice off any s-padding rows and restore the PyTorch output layout.
    out2d = out_fold.reshape(M_pad, out_c)[:M]
    return out2d.reshape(B, N, out_c)[:, :, None, :]


def _reference(flow_x, weight, bias):
    B, N = flow_x.shape[0], flow_x.shape[1]
    in_c = math.prod(flow_x.shape[2:])
    return (flow_x.reshape(B, N, in_c) @ weight.T + bias)[:, :, None, :]


if __name__ == "__main__":
    key = jax.random.PRNGKey(0)
    k_x, k_w, k_b, k_x2 = jax.random.split(key, 4)

    # Shapes consistent with the module: flow_x (B, N, H, D), in_c = H*D.
    B, N, H, D = 2, 16, 4, 2
    in_c, out_c = H * D, 4

    flow_x = jax.random.normal(k_x, (B, N, H, D), dtype=jnp.float32)

    # Deterministic nn.Linear-style init: U(-1/sqrt(in_c), 1/sqrt(in_c))
    bound = 1.0 / (in_c ** 0.5)
    weight = jax.random.uniform(k_w, (out_c, in_c), jnp.float32, -bound, bound)
    bias = jax.random.uniform(k_b, (out_c,), jnp.float32, -bound, bound)

    out = baseline_forward(flow_x, weight, bias)
    out = jax.block_until_ready(out)
    ref = _reference(flow_x, weight, bias)
    assert out.shape == (B, N, 1, out_c), out.shape
    assert jnp.allclose(out, ref, atol=1e-4, rtol=1e-4)

    # Second (still small) shape exercising the multi-step grid and the
    # B*N % s != 0 remainder path.
    B2, N2 = 4, 250
    flow_x2 = jax.random.normal(k_x2, (B2, N2, H, D), dtype=jnp.float32)
    out2 = jax.block_until_ready(baseline_forward(flow_x2, weight, bias))
    ref2 = _reference(flow_x2, weight, bias)
    assert out2.shape == (B2, N2, 1, out_c), out2.shape
    assert jnp.allclose(out2, ref2, atol=1e-4, rtol=1e-4)

    print("KERNEL_OK")
</pallas_src>

<mosaic_0001>
module attributes {stable_mosaic.version = 11 : i64} {
  func.func @_folded_linear_kernel(%arg0: i32, %arg1: memref<256x128xf32, #tpu.memory_space<vmem>>, %arg2: memref<1x128xf32, #tpu.memory_space<vmem>>, %arg3: memref<1x256xf32, #tpu.memory_space<vmem>>, %arg4: memref<1x128xf32, #tpu.memory_space<vmem>>) attributes {dimension_semantics = [#tpu.dimension_semantics<parallel>], iteration_bounds = array<i64: 1>, scalar_prefetch = 0 : i64, scratch_operands = 0 : i64, tpu.core_type = #tpu.core_type<tc>, window_params = [{pipeline_mode = #tpu.pipeline_mode<synchronous>, transform_indices = @transform_0, window_bounds = array<i64: 256, 128>}, {pipeline_mode = #tpu.pipeline_mode<synchronous>, transform_indices = @transform_1, window_bounds = array<i64: 1, 128>}, {transform_indices = @transform_2, window_bounds = array<i64: 1, 256>}, {transform_indices = @transform_3, window_bounds = array<i64: 1, 128>}]} {
    %c0 = arith.constant 0 : index
    %c0_0 = arith.constant 0 : index
    %0 = vector.load %arg3[%c0, %c0_0] : memref<1x256xf32, #tpu.memory_space<vmem>>, vector<1x256xf32>
    %c0_1 = arith.constant 0 : index
    %c0_2 = arith.constant 0 : index
    %1 = vector.load %arg1[%c0_1, %c0_2] : memref<256x128xf32, #tpu.memory_space<vmem>>, vector<256x128xf32>
    %cst = arith.constant dense<0.000000e+00> : vector<1x128xf32>
    %2 = tpu.matmul %0, %1, %cst {dimension_numbers = #tpu.dot_dimension_numbers<[1], [0], [0], [1], [0, 0, 1, 1], [], []>} : vector<1x256xf32>, vector<256x128xf32>, vector<1x128xf32> -> vector<1x128xf32>
    %c0_3 = arith.constant 0 : index
    %c0_4 = arith.constant 0 : index
    %3 = vector.load %arg2[%c0_3, %c0_4] : memref<1x128xf32, #tpu.memory_space<vmem>>, vector<1x128xf32>
    %4 = arith.addf %2, %3 : vector<1x128xf32>
    %c0_5 = arith.constant 0 : index
    %c0_6 = arith.constant 0 : index
    %5 = vector.load %arg4[%c0_5, %c0_6] : memref<1x128xf32, #tpu.memory_space<vmem>>, vector<1x128xf32>
    tpu.vector_store %arg4[%c0_5, %c0_6], %4 {strides = array<i32>} : memref<1x128xf32, #tpu.memory_space<vmem>>, vector<1x128xf32>,
    return
  }
  func.func @transform_0(%arg0: i32) -> (i32, i32) {
    %c0_i32 = arith.constant 0 : i32
    %c0_i32_0 = arith.constant 0 : i32
    %c0_i32_1 = arith.constant 0 : i32
    return %c0_i32, %c0_i32_0 : i32, i32
  }
  func.func @transform_1(%arg0: i32) -> (i32, i32) {
    %c0_i32 = arith.constant 0 : i32
    %c0_i32_0 = arith.constant 0 : i32
    %c0_i32_1 = arith.constant 0 : i32
    return %c0_i32, %c0_i32_0 : i32, i32
  }
  func.func @transform_2(%arg0: i32) -> (i32, i32) {
    %c0_i32 = arith.constant 0 : i32
    %c0_i32_0 = arith.constant 0 : i32
    return %arg0, %c0_i32 : i32, i32
  }
  func.func @transform_3(%arg0: i32) -> (i32, i32) {
    %c0_i32 = arith.constant 0 : i32
    %c0_i32_0 = arith.constant 0 : i32
    return %arg0, %c0_i32 : i32, i32
  }
}

</mosaic_0001>

<llo_original>
// kernel: tpu_custom_call.1
$region0: #{tpu_custom_call.1}
  #allocation0 [shape = 'u32[]', space=smem, size = 0x4, offset = 0x4, fixed_abs, tag = 'smem constant byte address 0x4 - core index']
  #allocation1 [shape = 'u32[144,128]{1,0:T(1,128)}', space=vmem, size = 0x12000, scoped, tag = 'internal scratch']
  %s0 = inlined_call_operand.hbm [shape: f32[256,128], index: 0, kind: input, shape index: {}]
  %s1 = inlined_call_operand.vmem [shape: f32[1,128], index: 1, kind: input, shape index: {}]
  %s2 = inlined_call_operand.vmem [shape: f32[1,256], index: 2, kind: input, shape index: {}]
  %s3 = inlined_call_operand.hbm [shape: f32[1,128], index: 3, kind: output, shape index: {}]
  %s4 = sld [smem:[#allocation0]]
  $region26: #{tpu_custom_call.1} parent=0
    _
  %s6 = ssub.s32 1, %s4
  %s7 = scalar_select 0, %s6, %s4
  $region1: #{tpu_custom_call.1} parent=0
    #allocation2 [shape = 'u8[131072]{0}', space=vmem, size = 0x20000, scoped, tag = 'input window, operand 0, single buffered']
    #allocation3 [shape = 's32[1]{0}', space=sflag, size = 0x4, scoped, tag = 'scoped memory for tpu_custom_call.1']
    #allocation4 [shape = 's32[1]{0}', space=sflag, size = 0x4, scoped, tag = 'scoped memory for tpu_custom_call.1']
    #allocation5 [shape = 'u8[512]{0}', space=vmem, size = 0x400, scoped, tag = 'output window, operand 0, single buffered']
    %8 = vsyncpa [#allocation3], 0
    %9 = vsyncpa [#allocation4], 0
    // Predicated region
    $region2: #{tpu_custom_call.1} parent=1 // pred_check
      _
    $region3: #{tpu_custom_call.1} parent=1 // pred_check_branch
      %11 = sbr.rel (0) target = $region5
    $region4: #{tpu_custom_call.1} parent=1 // pred_region
      %s13 = ssub.s32 4096, 4096
      %14 = vsyncadd [#allocation3], %s13
      %s15 = sshll.u32 [#allocation2], 4
      %s16 = int_to_ptr.vmem [resolvable:$true] %s15
      %21 = dma.hbm_to_vmem [thread:$0]  %s0, 4096, %s16, [#allocation3], 128, 128, 8
    $region5: #{tpu_custom_call.1} parent=1 // pred_fallthru
      _
    // Predicated region
    $region6: #{tpu_custom_call.1} parent=1 // pred_check
      _
    $region7: #{tpu_custom_call.1} parent=1 // pred_check_branch
      %23 = sbr.rel (0) target = $region9
    $region8: #{tpu_custom_call.1} parent=1 // pred_region
      _
    $region9: #{tpu_custom_call.1} parent=1 // pred_fallthru
      _
    // Predicated region
    $region10: #{tpu_custom_call.1} parent=1 // pred_check
      _
    $region11: #{tpu_custom_call.1} parent=1 // pred_check_branch
      %25 = sbr.rel (0) target = $region13
    $region12: #{tpu_custom_call.1} parent=1 // pred_region
      _
    $region13: #{tpu_custom_call.1} parent=1 // pred_fallthru
      _
    // Predicated region
    $region14: #{tpu_custom_call.1} parent=1 // pred_check
      _
    $region15: #{tpu_custom_call.1} parent=1 // pred_check_branch
      %27 = sbr.rel (0) target = $region17
    $region16: #{tpu_custom_call.1} parent=1 // pred_region
      %28 = dma.done [#allocation3], 4096
    $region17: #{tpu_custom_call.1} parent=1 // pred_fallthru
      _
    %v29 = vld [vmem:[%s2] sm:$0x3]
    %v30 = vld [vmem:[#allocation2] sm:$0xff]
    %v31 = vld [vmem:[#allocation2 + $0x8] sm:$0xff]
    %v32 = vld [vmem:[#allocation2 + $0x10] sm:$0xff]
    %v33 = vld [vmem:[#allocation2 + $0x18] sm:$0xff]
    %v34 = vld [vmem:[#allocation2 + $0x20] sm:$0xff]
    %v35 = vld [vmem:[#allocation2 + $0x28] sm:$0xff]
    %v36 = vld [vmem:[#allocation2 + $0x30] sm:$0xff]
    %v37 = vld [vmem:[#allocation2 + $0x38] sm:$0xff]
    %v38 = vld [vmem:[#allocation2 + $0x40] sm:$0xff]
    %v39 = vld [vmem:[#allocation2 + $0x48] sm:$0xff]
    %v40 = vld [vmem:[#allocation2 + $0x50] sm:$0xff]
    %v41 = vld [vmem:[#allocation2 + $0x58] sm:$0xff]
    %v42 = vld [vmem:[#allocation2 + $0x60] sm:$0xff]
    %v43 = vld [vmem:[#allocation2 + $0x68] sm:$0xff]
    %v44 = vld [vmem:[#allocation2 + $0x70] sm:$0xff]
    %v45 = vld [vmem:[#allocation2 + $0x78] sm:$0xff]
    %v46 = vld [vmem:[#allocation2 + $0x80] sm:$0xff]
    %v47 = vld [vmem:[#allocation2 + $0x88] sm:$0xff]
    %v48 = vld [vmem:[#allocation2 + $0x90] sm:$0xff]
    %v49 = vld [vmem:[#allocation2 + $0x98] sm:$0xff]
    %v50 = vld [vmem:[#allocation2 + $0xa0] sm:$0xff]
    %v51 = vld [vmem:[#allocation2 + $0xa8] sm:$0xff]
    %v52 = vld [vmem:[#allocation2 + $0xb0] sm:$0xff]
    %v53 = vld [vmem:[#allocation2 + $0xb8] sm:$0xff]
    %v54 = vld [vmem:[#allocation2 + $0xc0] sm:$0xff]
    %v55 = vld [vmem:[#allocation2 + $0xc8] sm:$0xff]
    %v56 = vld [vmem:[#allocation2 + $0xd0] sm:$0xff]
    %v57 = vld [vmem:[#allocation2 + $0xd8] sm:$0xff]
    %v58 = vld [vmem:[#allocation2 + $0xe0] sm:$0xff]
    %v59 = vld [vmem:[#allocation2 + $0xe8] sm:$0xff]
    %v60 = vld [vmem:[#allocation2 + $0xf0] sm:$0xff]
    %v61 = vld [vmem:[#allocation2 + $0xf8] sm:$0xff]
    %v62 = vld [vmem:[%s1] sm:$0x1]
    %v64 = vlaneseq
    %v65 = vshrl.u32 %v64, 7
    %v66 = vsub.s32 0, %v65
    %v67 = vrot.slane %v29, %v66
    %v68 = vlaneseq
    %v69 = vshrl.u32 %v68, 7
    %v70 = vsub.s32 1, %v69
    %v71 = vrot.slane %v29, %v70
    %74 = vmatprep.subr.mxu0 0.0
    %75 = vmatpush1.msra.mxu0 %v30
    %76 = vmatprep.subr.mxu0 0.0
    %77 = vmatpush1.msra.mxu0 %v31
    %78 = vmatprep.subr.mxu0 0.0
    %79 = vmatpush1.msra.mxu0 %v32
    %80 = vmatprep.subr.mxu0 0.0
    %81 = vmatpush1.msra.mxu0 %v33
    %82 = vmatprep.subr.mxu0 0.0
    %83 = vmatpush1.msra.mxu0 %v34
    %84 = vmatprep.subr.mxu0 0.0
    %85 = vmatpush1.msra.mxu0 %v35
    %86 = vmatprep.subr.mxu0 0.0
    %87 = vmatpush1.msra.mxu0 %v36
    %88 = vmatprep.subr.mxu0 0.0
    %89 = vmatpush1.msra.mxu0 %v37
    %90 = vmatprep.subr.mxu0 0.0
    %91 = vmatpush1.msra.mxu0 %v38
    %92 = vmatprep.subr.mxu0 0.0
    %93 = vmatpush1.msra.mxu0 %v39
    %94 = vmatprep.subr.mxu0 0.0
    %95 = vmatpush1.msra.mxu0 %v40
    %96 = vmatprep.subr.mxu0 0.0
    %97 = vmatpush1.msra.mxu0 %v41
    %98 = vmatprep.subr.mxu0 0.0
    %99 = vmatpush1.msra.mxu0 %v42
    %100 = vmatprep.subr.mxu0 0.0
    %101 = vmatpush1.msra.mxu0 %v43
    %102 = vmatprep.subr.mxu0 0.0
    %103 = vmatpush1.msra.mxu0 %v44
    %104 = vmatprep.subr.mxu0 0.0
    %105 = vmatpush1.msra.mxu0 %v45
    %106 = vmatprep.subr.mxu0 0.0
    %107 = vmatpush1.msra.mxu0 %v46
    %108 = vmatprep.subr.mxu0 0.0
    %109 = vmatpush1.msra.mxu0 %v47
    %110 = vmatprep.subr.mxu0 0.0
    %111 = vmatpush1.msra.mxu0 %v48
    %112 = vmatprep.subr.mxu0 0.0
    %113 = vmatpush1.msra.mxu0 %v49
    %114 = vmatprep.subr.mxu0 0.0
    %115 = vmatpush1.msra.mxu0 %v50
    %116 = vmatprep.subr.mxu0 0.0
    %117 = vmatpush1.msra.mxu0 %v51
    %118 = vmatprep.subr.mxu0 0.0
    %119 = vmatpush1.msra.mxu0 %v52
    %120 = vmatprep.subr.mxu0 0.0
    %121 = vmatpush1.msra.mxu0 %v53
    %122 = vmatprep.subr.mxu0 0.0
    %123 = vmatpush1.msra.mxu0 %v54
    %124 = vmatprep.subr.mxu0 0.0
    %125 = vmatpush1.msra.mxu0 %v55
    %126 = vmatprep.subr.mxu0 0.0
    %127 = vmatpush1.msra.mxu0 %v56
    %128 = vmatprep.subr.mxu0 0.0
    %129 = vmatpush1.msra.mxu0 %v57
    %130 = vmatprep.subr.mxu0 0.0
    %131 = vmatpush1.msra.mxu0 %v58
    %132 = vmatprep.subr.mxu0 0.0
    %133 = vmatpush1.msra.mxu0 %v59
    %134 = vmatprep.subr.mxu0 0.0
    %135 = vmatpush1.msra.mxu0 %v60
    %136 = vmatprep.subr.mxu0 0.0
    %137 = vmatpush1.msra.mxu0 %v61
    %138 = vmatprep.mubr.f32.mxu0 %v71
    %139 = vmatmul.mubr.f32.gmra.mrb[0].mxu0 %v67
    %v140 = vpop.f32.mrb[0].mxu0
    %v141 = vadd.f32 %v62, %v140
    %v142 = vpop.f32.mrb[0].mxu0
    %143 = vdwg.mxu0
    %144 = vst [vmem:[#allocation5] sm:$0x1] %v141
    // Predicated region
    $region18: #{tpu_custom_call.1} parent=1 // pred_check
      _
    $region19: #{tpu_custom_call.1} parent=1 // pred_check_branch
      %146 = sbr.rel (0) target = $region21
    $region20: #{tpu_custom_call.1} parent=1 // pred_region
      %s148 = ssub.s32 16, 16
      %149 = vsyncadd [#allocation4], %s148
      %s151 = sshll.u32 [#allocation5], 4
      %s152 = int_to_ptr.vmem [resolvable:$true] %s151
      %154 = dma.vmem_to_hbm [thread:$0]  %s152, 16, %s3, [#allocation4]
    $region21: #{tpu_custom_call.1} parent=1 // pred_fallthru
      _
    // Predicated region
    $region22: #{tpu_custom_call.1} parent=1 // pred_check
      _
    $region23: #{tpu_custom_call.1} parent=1 // pred_check_branch
      %156 = sbr.rel (0) target = $region25
    $region24: #{tpu_custom_call.1} parent=1 // pred_region
      %157 = dma.done [#allocation4], 16
    $region25: #{tpu_custom_call.1} parent=1 // pred_fallthru
      _
    %158 = vsyncpa [#allocation3], 1
    %159 = vsyncpa [#allocation4], 1

</llo_original>
